<compile_context>
chip_gen: v7x
topology: tpu7x:2x2x1
jax: 0.10.0
libtpu: 0.0.40
codegen_flags: <defaults>
</compile_context>

<pallas_src>
import functools

import jax
import jax.numpy as jnp
from jax import lax
from jax.experimental import pallas as pl
from jax.experimental.pallas import tpu as pltpu


def _gcn_kernel(u_feat_ref, v_feat_ref, wcum_ref, bias_ref, support_ref,
                cinv_ref, rinv_ref, zu_ref, zv_ref):
    r = pl.program_id(0)

    @pl.when(r == 0)
    def _():
        zu_ref[...] = jnp.zeros_like(zu_ref)
        zv_ref[...] = jnp.zeros_like(zv_ref)

    w = wcum_ref[0]        # (D, Hp)  cumulative weight  sum_{k<=r} W[k]
    a = support_ref[0]     # (Nu, Nv)
    cinv = cinv_ref[0]     # (Nu, 1)  1/sqrt(row sums of support[r]),  0 if sum==0
    rinv = rinv_ref[0]     # (Nv, 1)  1/sqrt(col sums of support[r]),  0 if sum==0

    # u branch:  z_u += diag(cinv) @ A @ diag(rinv) @ v_feat @ W_r
    #            == cinv * ((A @ (rinv * v_feat)) @ W_r)
    v_scaled = v_feat_ref[...] * rinv                                    # (Nv, D)
    agg_u = jnp.dot(a, v_scaled, preferred_element_type=jnp.float32)     # (Nu, D)
    zu_ref[...] += cinv * jnp.dot(agg_u, w,
                                  preferred_element_type=jnp.float32)    # (Nu, Hp)

    # v branch: normalize(A.T) == normalize(A).T, so
    #            z_v += rinv * ((A^T @ (cinv * u_feat)) @ W_r)
    # Contracting lhs dim 0 keeps the transpose inside the MXU operand path
    # (equivalent to pl.dot(a, u_scaled, trans_a=True)).
    u_scaled = u_feat_ref[...] * cinv                                    # (Nu, D)
    agg_v = lax.dot_general(a, u_scaled, (((0,), (0,)), ((), ())),
                            preferred_element_type=jnp.float32)          # (Nv, D)
    zv_ref[...] += rinv * jnp.dot(agg_v, w,
                                  preferred_element_type=jnp.float32)    # (Nv, Hp)

    @pl.when(r == pl.num_programs(0) - 1)
    def _():
        b = bias_ref[...]                                                # (1, Hp)
        zu_ref[...] = jnp.maximum(zu_ref[...] + b, 0.0)
        zv_ref[...] = jnp.maximum(zv_ref[...] + b, 0.0)


@jax.jit
def graph_convolution_core(u_feat, v_feat, weight, bias, support):
    """Returns (z_u, z_v) for ALL users / items (pre-gather), bias + relu applied."""
    num_ratings, num_users, num_items = support.shape
    input_dim = u_feat.shape[1]
    hidden = weight.shape[2]
    hidden_pad = ((hidden + 127) // 128) * 128  # lane-dense output / matmul N dim

    # Cumulative weights W_cum[r] = sum_{k<=r} W[k] (matches the running
    # `u_weight = u_weight + self.u_weight[r]` accumulation in the module),
    # zero-padded along hidden to the lane-dense width.
    wcum = jnp.cumsum(weight, axis=0)                        # (R, D, H)
    if hidden_pad != hidden:
        wcum = jnp.pad(wcum, ((0, 0), (0, 0), (0, hidden_pad - hidden)))
        bias_p = jnp.pad(bias, (0, hidden_pad - hidden))
    else:
        bias_p = bias
    bias2d = bias_p.reshape(1, hidden_pad)

    # Per-rating diagonal normalization vectors, precomputed once in JAX
    # (replaces two full XLU reductions over the Nu x Nv block per grid step):
    #   normalize(A) = diag(cinv) @ A @ diag(rinv)
    col_sums = jnp.sum(support, axis=1)                      # torch.sum(mx, 0) -> (R, Nv)
    row_sums = jnp.sum(support, axis=2)                      # torch.sum(mx, 1) -> (R, Nu)
    rinv = jnp.where(col_sums > 0.0, lax.rsqrt(col_sums), 0.0)[..., None]  # (R, Nv, 1)
    cinv = jnp.where(row_sums > 0.0, lax.rsqrt(row_sums), 0.0)[..., None]  # (R, Nu, 1)

    # Explicit VMEM budget (support is the only large per-step-changing input).
    vmem_bytes = 4 * (
        2 * num_users * num_items                      # support double-buffer
        + 2 * (num_users + num_items) * input_dim      # u/v features (conservative)
        + 2 * (input_dim * hidden_pad + hidden_pad)    # wcum block + bias
        + 4 * (num_users + num_items)                  # diag scale vectors
        + (num_users + num_items) * hidden_pad         # resident output accumulators
    )
    vmem_limit = int(min(max(2 * vmem_bytes, 16 << 20), 64 << 20))

    grid_spec = pltpu.PrefetchScalarGridSpec(
        num_scalar_prefetch=0,
        grid=(num_ratings,),
        in_specs=[
            pl.BlockSpec((num_users, input_dim), lambda r: (0, 0)),
            pl.BlockSpec((num_items, input_dim), lambda r: (0, 0)),
            pl.BlockSpec((1, input_dim, hidden_pad), lambda r: (r, 0, 0)),
            pl.BlockSpec((1, hidden_pad), lambda r: (0, 0)),
            pl.BlockSpec((1, num_users, num_items), lambda r: (r, 0, 0)),
            pl.BlockSpec((1, num_users, 1), lambda r: (r, 0, 0)),
            pl.BlockSpec((1, num_items, 1), lambda r: (r, 0, 0)),
        ],
        out_specs=[
            pl.BlockSpec((num_users, hidden_pad), lambda r: (0, 0)),
            pl.BlockSpec((num_items, hidden_pad), lambda r: (0, 0)),
        ],
    )

    z_u, z_v = pl.pallas_call(
        _gcn_kernel,
        grid_spec=grid_spec,
        out_shape=(
            jax.ShapeDtypeStruct((num_users, hidden_pad), jnp.float32),
            jax.ShapeDtypeStruct((num_items, hidden_pad), jnp.float32),
        ),
        compiler_params=pltpu.CompilerParams(
            dimension_semantics=("arbitrary",),
            vmem_limit_bytes=vmem_limit),
    )(u_feat, v_feat, wcum, bias2d, support, cinv, rinv)

    # Drop the lane padding.
    return z_u[:, :hidden], z_v[:, :hidden]


def graph_convolution(u_feat, v_feat, u_ids, v_ids, support, weight, bias):
    z_u, z_v = graph_convolution_core(u_feat, v_feat, weight, bias, support)
    # Row gather commutes with the sum over ratings -> done outside the kernel.
    return z_u[u_ids], z_v[v_ids]


def _reference(u_feat, v_feat, u_ids, v_ids, support, weight, bias):
    """Pure-JAX reference mirroring the PyTorch forward (dropout in eval mode)."""
    def normalize(a):
        rs = jnp.sum(a, axis=0)
        r_inv = jnp.where(rs > 0, rs ** -0.5, 0.0)
        cs = jnp.sum(a, axis=1)
        c_inv = jnp.where(cs > 0, cs ** -0.5, 0.0)
        return c_inv[:, None] * a * r_inv[None, :]

    w_acc = jnp.zeros_like(weight[0])
    zs_u, zs_v = [], []
    for r in range(support.shape[0]):
        w_acc = w_acc + weight[r]
        tmp_u = u_feat @ w_acc
        tmp_v = v_feat @ w_acc
        a_n = normalize(support[r])
        a_nt = normalize(support[r].T)
        zs_u.append(a_n[u_ids] @ tmp_v)
        zs_v.append(a_nt[v_ids] @ tmp_u)
    z_u = sum(zs_u) + bias
    z_v = sum(zs_v) + bias
    return jnp.maximum(z_u, 0.0), jnp.maximum(z_v, 0.0)


if __name__ == "__main__":
    num_users, num_items = 16, 24
    input_dim, hidden_dim, num_classes = 8, 32, 5

    key = jax.random.PRNGKey(0)
    k1, k2, k3, k4, k5 = jax.random.split(key, 5)

    u_feat = jax.random.normal(k1, (num_users, input_dim), dtype=jnp.float32)
    v_feat = jax.random.normal(k2, (num_items, input_dim), dtype=jnp.float32)
    # Nonnegative "rating indicator" support, like a sparse adjacency per rating.
    support = (jax.random.uniform(k3, (num_classes, num_users, num_items),
                                  dtype=jnp.float32) > 0.6).astype(jnp.float32)

    # Xavier-normal init for the shared (num_classes, input_dim, hidden) weight.
    fan_in, fan_out = input_dim * hidden_dim, num_classes * hidden_dim
    std = (2.0 / (fan_in + fan_out)) ** 0.5
    weight = std * jax.random.normal(
        k4, (num_classes, input_dim, hidden_dim), dtype=jnp.float32)
    bias = 0.01 * jax.random.normal(k5, (hidden_dim,), dtype=jnp.float32)

    u_ids = jnp.arange(num_users)
    v_ids = jnp.arange(num_items)

    u_out, v_out = graph_convolution(u_feat, v_feat, u_ids, v_ids,
                                     support, weight, bias)
    jax.block_until_ready((u_out, v_out))

    u_ref, v_ref = _reference(u_feat, v_feat, u_ids, v_ids,
                              support, weight, bias)
    assert u_out.shape == (num_users, hidden_dim)
    assert v_out.shape == (num_items, hidden_dim)
    assert jnp.allclose(u_out, u_ref, atol=1e-4, rtol=1e-4)
    assert jnp.allclose(v_out, v_ref, atol=1e-4, rtol=1e-4)

    print("KERNEL_OK")
</pallas_src>

<mosaic_0001>
module attributes {stable_mosaic.version = 11 : i64} {
  func.func @_gcn_kernel(%arg0: i32, %arg1: memref<16x8xf32, #tpu.memory_space<vmem>>, %arg2: memref<24x8xf32, #tpu.memory_space<vmem>>, %arg3: memref<1x8x128xf32, #tpu.memory_space<vmem>>, %arg4: memref<1x128xf32, #tpu.memory_space<vmem>>, %arg5: memref<1x16x24xf32, #tpu.memory_space<vmem>>, %arg6: memref<1x16x1xf32, #tpu.memory_space<vmem>>, %arg7: memref<1x24x1xf32, #tpu.memory_space<vmem>>, %arg8: memref<16x128xf32, #tpu.memory_space<vmem>>, %arg9: memref<24x128xf32, #tpu.memory_space<vmem>>) attributes {dimension_semantics = [#tpu.dimension_semantics<arbitrary>], iteration_bounds = array<i64: 5>, scalar_prefetch = 0 : i64, scratch_operands = 0 : i64, tpu.core_type = #tpu.core_type<tc>, window_params = [{pipeline_mode = #tpu.pipeline_mode<synchronous>, transform_indices = @transform_0, window_bounds = array<i64: 16, 8>}, {pipeline_mode = #tpu.pipeline_mode<synchronous>, transform_indices = @transform_1, window_bounds = array<i64: 24, 8>}, {transform_indices = @transform_2, window_bounds = array<i64: 1, 8, 128>}, {pipeline_mode = #tpu.pipeline_mode<synchronous>, transform_indices = @transform_3, window_bounds = array<i64: 1, 128>}, {transform_indices = @transform_4, window_bounds = array<i64: 1, 16, 24>}, {transform_indices = @transform_5, window_bounds = array<i64: 1, 16, 1>}, {transform_indices = @transform_6, window_bounds = array<i64: 1, 24, 1>}, {pipeline_mode = #tpu.pipeline_mode<synchronous>, transform_indices = @transform_7, window_bounds = array<i64: 16, 128>}, {pipeline_mode = #tpu.pipeline_mode<synchronous>, transform_indices = @transform_8, window_bounds = array<i64: 24, 128>}]} {
    %c0_i32 = arith.constant 0 : i32
    %0 = arith.cmpi eq, %arg0, %c0_i32 : i32
    %1 = arith.extui %0 : i1 to i32
    %c0_i32_0 = arith.constant 0 : i32
    %2 = arith.cmpi ne, %1, %c0_i32_0 : i32
    scf.if %2 {
      %cst_28 = arith.constant 0.000000e+00 : f32
      %34 = vector.broadcast %cst_28 : f32 to vector<16x128xf32>
      %c0_29 = arith.constant 0 : index
      %c0_30 = arith.constant 0 : index
      %35 = vector.load %arg8[%c0_29, %c0_30] : memref<16x128xf32, #tpu.memory_space<vmem>>, vector<16x128xf32>
      tpu.vector_store %arg8[%c0_29, %c0_30], %34 {strides = array<i32>} : memref<16x128xf32, #tpu.memory_space<vmem>>, vector<16x128xf32>,
      %cst_31 = arith.constant 0.000000e+00 : f32
      %36 = vector.broadcast %cst_31 : f32 to vector<24x128xf32>
      %c0_32 = arith.constant 0 : index
      %c0_33 = arith.constant 0 : index
      %37 = vector.load %arg9[%c0_32, %c0_33] : memref<24x128xf32, #tpu.memory_space<vmem>>, vector<24x128xf32>
      tpu.vector_store %arg9[%c0_32, %c0_33], %36 {strides = array<i32>} : memref<24x128xf32, #tpu.memory_space<vmem>>, vector<24x128xf32>,
    } else {
    }
    %c0 = arith.constant 0 : index
    %c0_1 = arith.constant 0 : index
    %c0_2 = arith.constant 0 : index
    %3 = vector.load %arg3[%c0, %c0_1, %c0_2] : memref<1x8x128xf32, #tpu.memory_space<vmem>>, vector<1x8x128xf32>
    %4 = vector.shape_cast %3 : vector<1x8x128xf32> to vector<8x128xf32>
    %c0_3 = arith.constant 0 : index
    %c0_4 = arith.constant 0 : index
    %c0_5 = arith.constant 0 : index
    %5 = vector.load %arg5[%c0_3, %c0_4, %c0_5] : memref<1x16x24xf32, #tpu.memory_space<vmem>>, vector<1x16x24xf32>
    %6 = vector.shape_cast %5 : vector<1x16x24xf32> to vector<16x24xf32>
    %c0_6 = arith.constant 0 : index
    %c0_7 = arith.constant 0 : index
    %c0_8 = arith.constant 0 : index
    %7 = vector.load %arg6[%c0_6, %c0_7, %c0_8] : memref<1x16x1xf32, #tpu.memory_space<vmem>>, vector<1x16x1xf32>
    %8 = vector.shape_cast %7 : vector<1x16x1xf32> to vector<16x1xf32>
    %c0_9 = arith.constant 0 : index
    %c0_10 = arith.constant 0 : index
    %c0_11 = arith.constant 0 : index
    %9 = vector.load %arg7[%c0_9, %c0_10, %c0_11] : memref<1x24x1xf32, #tpu.memory_space<vmem>>, vector<1x24x1xf32>
    %10 = vector.shape_cast %9 : vector<1x24x1xf32> to vector<24x1xf32>
    %c0_12 = arith.constant 0 : index
    %c0_13 = arith.constant 0 : index
    %11 = vector.load %arg2[%c0_12, %c0_13] : memref<24x8xf32, #tpu.memory_space<vmem>>, vector<24x8xf32>
    %12 = vector.broadcast %10 : vector<24x1xf32> to vector<24x8xf32>
    %13 = arith.mulf %11, %12 : vector<24x8xf32>
    %cst = arith.constant dense<0.000000e+00> : vector<16x8xf32>
    %14 = tpu.matmul %6, %13, %cst {dimension_numbers = #tpu.dot_dimension_numbers<[1], [0], [0], [1], [0, 0, 1, 1], [], []>} : vector<16x24xf32>, vector<24x8xf32>, vector<16x8xf32> -> vector<16x8xf32>
    %c0_14 = arith.constant 0 : index
    %c0_15 = arith.constant 0 : index
    %15 = vector.load %arg8[%c0_14, %c0_15] : memref<16x128xf32, #tpu.memory_space<vmem>>, vector<16x128xf32>
    %cst_16 = arith.constant dense<0.000000e+00> : vector<16x128xf32>
    %16 = tpu.matmul %14, %4, %cst_16 {dimension_numbers = #tpu.dot_dimension_numbers<[1], [0], [0], [1], [0, 0, 1, 1], [], []>} : vector<16x8xf32>, vector<8x128xf32>, vector<16x128xf32> -> vector<16x128xf32>
    %17 = vector.broadcast %8 : vector<16x1xf32> to vector<16x128xf32>
    %18 = arith.mulf %17, %16 : vector<16x128xf32>
    %19 = arith.addf %15, %18 : vector<16x128xf32>
    %c0_17 = arith.constant 0 : index
    %c0_18 = arith.constant 0 : index
    %20 = vector.load %arg8[%c0_17, %c0_18] : memref<16x128xf32, #tpu.memory_space<vmem>>, vector<16x128xf32>
    tpu.vector_store %arg8[%c0_17, %c0_18], %19 {strides = array<i32>} : memref<16x128xf32, #tpu.memory_space<vmem>>, vector<16x128xf32>,
    %c0_19 = arith.constant 0 : index
    %c0_20 = arith.constant 0 : index
    %21 = vector.load %arg1[%c0_19, %c0_20] : memref<16x8xf32, #tpu.memory_space<vmem>>, vector<16x8xf32>
    %22 = vector.broadcast %8 : vector<16x1xf32> to vector<16x8xf32>
    %23 = arith.mulf %21, %22 : vector<16x8xf32>
    %cst_21 = arith.constant dense<0.000000e+00> : vector<24x8xf32>
    %24 = tpu.matmul %6, %23, %cst_21 {dimension_numbers = #tpu.dot_dimension_numbers<[0], [0], [1], [1], [0, 1, 1, 1], [], []>} : vector<16x24xf32>, vector<16x8xf32>, vector<24x8xf32> -> vector<24x8xf32>
    %c0_22 = arith.constant 0 : index
    %c0_23 = arith.constant 0 : index
    %25 = vector.load %arg9[%c0_22, %c0_23] : memref<24x128xf32, #tpu.memory_space<vmem>>, vector<24x128xf32>
    %cst_24 = arith.constant dense<0.000000e+00> : vector<24x128xf32>
    %26 = tpu.matmul %24, %4, %cst_24 {dimension_numbers = #tpu.dot_dimension_numbers<[1], [0], [0], [1], [0, 0, 1, 1], [], []>} : vector<24x8xf32>, vector<8x128xf32>, vector<24x128xf32> -> vector<24x128xf32>
    %27 = vector.broadcast %10 : vector<24x1xf32> to vector<24x128xf32>
    %28 = arith.mulf %27, %26 : vector<24x128xf32>
    %29 = arith.addf %25, %28 : vector<24x128xf32>
    %c0_25 = arith.constant 0 : index
    %c0_26 = arith.constant 0 : index
    %30 = vector.load %arg9[%c0_25, %c0_26] : memref<24x128xf32, #tpu.memory_space<vmem>>, vector<24x128xf32>
    tpu.vector_store %arg9[%c0_25, %c0_26], %29 {strides = array<i32>} : memref<24x128xf32, #tpu.memory_space<vmem>>, vector<24x128xf32>,
    %c4_i32 = arith.constant 4 : i32
    %31 = arith.cmpi eq, %arg0, %c4_i32 : i32
    %32 = arith.extui %31 : i1 to i32
    %c0_i32_27 = arith.constant 0 : i32
    %33 = arith.cmpi ne, %32, %c0_i32_27 : i32
    scf.if %33 {
      %c0_28 = arith.constant 0 : index
      %c0_29 = arith.constant 0 : index
      %34 = vector.load %arg4[%c0_28, %c0_29] : memref<1x128xf32, #tpu.memory_space<vmem>>, vector<1x128xf32>
      %c0_30 = arith.constant 0 : index
      %c0_31 = arith.constant 0 : index
      %35 = vector.load %arg8[%c0_30, %c0_31] : memref<16x128xf32, #tpu.memory_space<vmem>>, vector<16x128xf32>
      %36 = vector.broadcast %34 : vector<1x128xf32> to vector<16x128xf32>
      %37 = arith.addf %35, %36 : vector<16x128xf32>
      %cst_32 = arith.constant 0.000000e+00 : f32
      %38 = vector.broadcast %cst_32 : f32 to vector<16x128xf32>
      %39 = arith.maximumf %37, %38 : vector<16x128xf32>
      %c0_33 = arith.constant 0 : index
      %c0_34 = arith.constant 0 : index
      %40 = vector.load %arg8[%c0_33, %c0_34] : memref<16x128xf32, #tpu.memory_space<vmem>>, vector<16x128xf32>
      tpu.vector_store %arg8[%c0_33, %c0_34], %39 {strides = array<i32>} : memref<16x128xf32, #tpu.memory_space<vmem>>, vector<16x128xf32>,
      %c0_35 = arith.constant 0 : index
      %c0_36 = arith.constant 0 : index
      %41 = vector.load %arg9[%c0_35, %c0_36] : memref<24x128xf32, #tpu.memory_space<vmem>>, vector<24x128xf32>
      %42 = vector.broadcast %34 : vector<1x128xf32> to vector<24x128xf32>
      %43 = arith.addf %41, %42 : vector<24x128xf32>
      %cst_37 = arith.constant 0.000000e+00 : f32
      %44 = vector.broadcast %cst_37 : f32 to vector<24x128xf32>
      %45 = arith.maximumf %43, %44 : vector<24x128xf32>
      %c0_38 = arith.constant 0 : index
      %c0_39 = arith.constant 0 : index
      %46 = vector.load %arg9[%c0_38, %c0_39] : memref<24x128xf32, #tpu.memory_space<vmem>>, vector<24x128xf32>
      tpu.vector_store %arg9[%c0_38, %c0_39], %45 {strides = array<i32>} : memref<24x128xf32, #tpu.memory_space<vmem>>, vector<24x128xf32>,
    } else {
    }
    return
  }
  func.func @transform_0(%arg0: i32) -> (i32, i32) {
    %c0_i32 = arith.constant 0 : i32
    %c0_i32_0 = arith.constant 0 : i32
    %c0_i32_1 = arith.constant 0 : i32
    return %c0_i32, %c0_i32_0 : i32, i32
  }
  func.func @transform_1(%arg0: i32) -> (i32, i32) {
    %c0_i32 = arith.constant 0 : i32
    %c0_i32_0 = arith.constant 0 : i32
    %c0_i32_1 = arith.constant 0 : i32
    return %c0_i32, %c0_i32_0 : i32, i32
  }
  func.func @transform_2(%arg0: i32) -> (i32, i32, i32) {
    %c0_i32 = arith.constant 0 : i32
    %c0_i32_0 = arith.constant 0 : i32
    %c0_i32_1 = arith.constant 0 : i32
    return %arg0, %c0_i32, %c0_i32_0 : i32, i32, i32
  }
  func.func @transform_3(%arg0: i32) -> (i32, i32) {
    %c0_i32 = arith.constant 0 : i32
    %c0_i32_0 = arith.constant 0 : i32
    %c0_i32_1 = arith.constant 0 : i32
    return %c0_i32, %c0_i32_0 : i32, i32
  }
  func.func @transform_4(%arg0: i32) -> (i32, i32, i32) {
    %c0_i32 = arith.constant 0 : i32
    %c0_i32_0 = arith.constant 0 : i32
    %c0_i32_1 = arith.constant 0 : i32
    return %arg0, %c0_i32, %c0_i32_0 : i32, i32, i32
  }
  func.func @transform_5(%arg0: i32) -> (i32, i32, i32) {
    %c0_i32 = arith.constant 0 : i32
    %c0_i32_0 = arith.constant 0 : i32
    %c0_i32_1 = arith.constant 0 : i32
    return %arg0, %c0_i32, %c0_i32_0 : i32, i32, i32
  }
  func.func @transform_6(%arg0: i32) -> (i32, i32, i32) {
    %c0_i32 = arith.constant 0 : i32
    %c0_i32_0 = arith.constant 0 : i32
    %c0_i32_1 = arith.constant 0 : i32
    return %arg0, %c0_i32, %c0_i32_0 : i32, i32, i32
  }
  func.func @transform_7(%arg0: i32) -> (i32, i32) {
    %c0_i32 = arith.constant 0 : i32
    %c0_i32_0 = arith.constant 0 : i32
    %c0_i32_1 = arith.constant 0 : i32
    return %c0_i32, %c0_i32_0 : i32, i32
  }
  func.func @transform_8(%arg0: i32) -> (i32, i32) {
    %c0_i32 = arith.constant 0 : i32
    %c0_i32_0 = arith.constant 0 : i32
    %c0_i32_1 = arith.constant 0 : i32
    return %c0_i32, %c0_i32_0 : i32, i32
  }
}

</mosaic_0001>

<llo_original>
// kernel: graph_convolution_core.1
$region0: #{graph_convolution_core.1}
  #allocation0 [shape = 'u32[]', space=smem, size = 0x4, offset = 0x4, fixed_abs, tag = 'smem constant byte address 0x4 - core index']
  #allocation1 [shape = 'u32[144,128]{1,0:T(1,128)}', space=vmem, size = 0x12000, scoped, tag = 'internal scratch']
  %s0 = inlined_call_operand.vmem [shape: f32[16,8], index: 0, kind: input, shape index: {}]
  %s1 = inlined_call_operand.vmem [shape: f32[24,8], index: 1, kind: input, shape index: {}]
  %s2 = inlined_call_operand.vmem [shape: f32[5,8,128], index: 2, kind: input, shape index: {}]
  %s3 = inlined_call_operand.vmem [shape: f32[1,128], index: 3, kind: input, shape index: {}]
  %s4 = inlined_call_operand.vmem [shape: f32[5,16,24], index: 4, kind: input, shape index: {}]
  %s5 = inlined_call_operand.vmem [shape: f32[5,16,1], index: 5, kind: input, shape index: {}]
  %s6 = inlined_call_operand.vmem [shape: f32[5,24,1], index: 6, kind: input, shape index: {}]
  %s7 = inlined_call_operand.hbm [shape: f32[16,128], index: 7, kind: output, shape index: {0}]
  %s8 = inlined_call_operand.hbm [shape: f32[24,128], index: 8, kind: output, shape index: {1}]
  %9 = xla_tuple %s7, %s8
  %s10 = sld [smem:[#allocation0]]
  $region77: #{graph_convolution_core.1} parent=0
    _
  %s12 = ssub.s32 1, %s10
  %s13 = scalar_select 0, %s12, %s10
  $region1: #{graph_convolution_core.1} parent=0
    #allocation2 [shape = 'u8[8192]{0}', space=vmem, size = 0x2000, scoped, tag = 'output window, operand 0, single buffered']
    #allocation3 [shape = 's32[2]{0}', space=sflag, size = 0x8, scoped, tag = 'scoped memory for graph_convolution_core.1']
    #allocation4 [shape = 'u8[12288]{0}', space=vmem, size = 0x3000, scoped, tag = 'output window, operand 1, single buffered']
    #allocation5 [shape = 's32[1]{0}', space=sflag, size = 0x4, scoped, tag = 'scoped memory for graph_convolution_core.1']
    %14 = vsyncpa [#allocation3], 0
    %15 = vsyncpa [#allocation5], 0
    loop: start=0, step=1, limit=7
    $region2: #{graph_convolution_core.1} parent=1 // loop_pre_header
      _
    $region3: #{graph_convolution_core.1} parent=1 // loop_header
      %s17 = sphi 0, %s21
      %p18 = scmp.ge.s32.totalorder %s17, 7
      %s25 = sphi 0, %s25
      %s27 = sphi 0, %s25
      %s28 = sphi 0, %s27
      %s42 = sphi 0, %s28
      %s46 = sphi 0, %s46
      %s48 = sphi 0, %s46
      %s49 = sphi 0, %s48
      %s63 = sphi 0, %s49
      %s69 = sphi 0, %s71
      %s72 = sphi 0, %s69
      %s73 = sphi 0, %s72
      %s89 = sphi 0, %s73
      %s93 = sphi 0, %s93
      %s95 = sphi 0, %s93
      %s96 = sphi 0, %s95
      %s110 = sphi 0, %s96
      %s116 = sphi 0, %s118
      %s119 = sphi 0, %s116
      %s120 = sphi 0, %s119
      %s136 = sphi 0, %s120
      %s142 = sphi 0, %s144
      %s145 = sphi 0, %s142
      %s146 = sphi 0, %s145
      %s162 = sphi 0, %s146
      %s168 = sphi 0, %s170
      %s171 = sphi 0, %s168
      %s172 = sphi 0, %s171
      %s188 = sphi 0, %s172
      %s192 = sphi 0, %s192
      %s194 = sphi 0, %s192
      %s195 = sphi 0, %s194
      %s209 = sphi 0, %s195
      %s213 = sphi 0, %s213
      %s215 = sphi 0, %s213
      %s216 = sphi 0, %s215
      %s230 = sphi 0, %s216
    $region4: #{graph_convolution_core.1} parent=1 // loop_header_branch
      %20 = sbr.rel (%p18) target = $region8
    $region5: #{graph_convolution_core.1} parent=1 // loop_body
      %s22 = ssub.s32 %s17, 1
      %s23 = ssub.s32 %s17, 2
      %s24 = sadd.s32 %s17, 1
      %s26 = sadd.s32 %s25, 1
      %p29 = scmp.eq.s32.totalorder %s17, 4
      %p30 = scmp.ne.s32.totalorder %s25, %s27
      %p31 = scmp.eq.s32.totalorder %s17, 0
      %p32 = por %p30, %p31
      %p33 = scmp.ne.s32.totalorder %s25, %s27
      %p34 = scmp.eq.s32.totalorder %s22, 4
      %p35 = por %p33, %p34
      %p36 = scmp.ne.s32.totalorder %s27, %s28
      %p37 = scmp.eq.s32.totalorder %s22, 0
      %p38 = por %p36, %p37
      %p39 = scmp.ne.s32.totalorder %s27, %s28
      %p40 = scmp.eq.s32.totalorder %s23, 4
      %p41 = por %p39, %p40
      %p43 = scmp.ne.s32.totalorder %s28, %s42
      %p44 = scmp.eq.s32.totalorder %s23, 0
      %p45 = por %p43, %p44
      %s47 = sadd.s32 %s46, 1
      %p50 = scmp.eq.s32.totalorder %s17, 4
      %p51 = scmp.ne.s32.totalorder %s46, %s48
      %p52 = scmp.eq.s32.totalorder %s17, 0
      %p53 = por %p51, %p52
      %p54 = scmp.ne.s32.totalorder %s46, %s48
      %p55 = scmp.eq.s32.totalorder %s22, 4
      %p56 = por %p54, %p55
      %p57 = scmp.ne.s32.totalorder %s48, %s49
      %p58 = scmp.eq.s32.totalorder %s22, 0
      %p59 = por %p57, %p58
      %p60 = scmp.ne.s32.totalorder %s48, %s49
      %p61 = scmp.eq.s32.totalorder %s23, 4
      %p62 = por %p60, %p61
      %p64 = scmp.ne.s32.totalorder %s49, %s63
      %p65 = scmp.eq.s32.totalorder %s23, 0
      %p66 = por %p64, %p65
      %s67 = ssub.s32 %s17, %s24
      %p68 = scmp.eq.s32.totalorder %s67, 0
      %s70 = sadd.s32 %s69, 1
      %s71 = scalar_select %p68, %s69, %s70
      %p74 = pneg %p68
      %p75 = scmp.eq.s32.totalorder %s17, 4
      %p76 = por %p74, %p75
      %p77 = scmp.ne.s32.totalorder %s69, %s72
      %p78 = scmp.eq.s32.totalorder %s17, 0
      %p79 = por %p77, %p78
      %p80 = scmp.ne.s32.totalorder %s69, %s72
      %p81 = scmp.eq.s32.totalorder %s22, 4
      %p82 = por %p80, %p81
      %p83 = scmp.ne.s32.totalorder %s72, %s73
      %p84 = scmp.eq.s32.totalorder %s22, 0
      %p85 = por %p83, %p84
      %p86 = scmp.ne.s32.totalorder %s72, %s73
      %p87 = scmp.eq.s32.totalorder %s23, 4
      %p88 = por %p86, %p87
      %p90 = scmp.ne.s32.totalorder %s73, %s89
      %p91 = scmp.eq.s32.totalorder %s23, 0
      %p92 = por %p90, %p91
      %s94 = sadd.s32 %s93, 1
      %p97 = scmp.eq.s32.totalorder %s17, 4
      %p98 = scmp.ne.s32.totalorder %s93, %s95
      %p99 = scmp.eq.s32.totalorder %s17, 0
      %p100 = por %p98, %p99
      %p101 = scmp.ne.s32.totalorder %s93, %s95
      %p102 = scmp.eq.s32.totalorder %s22, 4
      %p103 = por %p101, %p102
      %p104 = scmp.ne.s32.totalorder %s95, %s96
      %p105 = scmp.eq.s32.totalorder %s22, 0
      %p106 = por %p104, %p105
      %p107 = scmp.ne.s32.totalorder %s95, %s96
      %p108 = scmp.eq.s32.totalorder %s23, 4
      %p109 = por %p107, %p108
      %p111 = scmp.ne.s32.totalorder %s96, %s110
      %p112 = scmp.eq.s32.totalorder %s23, 0
      %p113 = por %p111, %p112
      %s114 = ssub.s32 %s17, %s24
      %p115 = scmp.eq.s32.totalorder %s114, 0
      %s117 = sadd.s32 %s116, 1
      %s118 = scalar_select %p115, %s116, %s117
      %p121 = pneg %p115
      %p122 = scmp.eq.s32.totalorder %s17, 4
      %p123 = por %p121, %p122
      %p124 = scmp.ne.s32.totalorder %s116, %s119
      %p125 = scmp.eq.s32.totalorder %s17, 0
      %p126 = por %p124, %p125
      %p127 = scmp.ne.s32.totalorder %s116, %s119
      %p128 = scmp.eq.s32.totalorder %s22, 4
      %p129 = por %p127, %p128
      %p130 = scmp.ne.s32.totalorder %s119, %s120
      %p131 = scmp.eq.s32.totalorder %s22, 0
      %p132 = por %p130, %p131
      %p133 = scmp.ne.s32.totalorder %s119, %s120
      %p134 = scmp.eq.s32.totalorder %s23, 4
      %p135 = por %p133, %p134
      %p137 = scmp.ne.s32.totalorder %s120, %s136
      %p138 = scmp.eq.s32.totalorder %s23, 0
      %p139 = por %p137, %p138
      %s140 = ssub.s32 %s17, %s24
      %p141 = scmp.eq.s32.totalorder %s140, 0
      %s143 = sadd.s32 %s142, 1
      %s144 = scalar_select %p141, %s142, %s143
      %p147 = pneg %p141
      %p148 = scmp.eq.s32.totalorder %s17, 4
      %p149 = por %p147, %p148
      %p150 = scmp.ne.s32.totalorder %s142, %s145
      %p151 = scmp.eq.s32.totalorder %s17, 0
      %p152 = por %p150, %p151
      %p153 = scmp.ne.s32.totalorder %s142, %s145
      %p154 = scmp.eq.s32.totalorder %s22, 4
      %p155 = por %p153, %p154
      %p156 = scmp.ne.s32.totalorder %s145, %s146
      %p157 = scmp.eq.s32.totalorder %s22, 0
      %p158 = por %p156, %p157
      %p159 = scmp.ne.s32.totalorder %s145, %s146
      %p160 = scmp.eq.s32.totalorder %s23, 4
      %p161 = por %p159, %p160
      %p163 = scmp.ne.s32.totalorder %s146, %s162
      %p164 = scmp.eq.s32.totalorder %s23, 0
      %p165 = por %p163, %p164
      %s166 = ssub.s32 %s17, %s24
      %p167 = scmp.eq.s32.totalorder %s166, 0
      %s169 = sadd.s32 %s168, 1
      %s170 = scalar_select %p167, %s168, %s169
      %p173 = pneg %p167
      %p174 = scmp.eq.s32.totalorder %s17, 4
      %p175 = por %p173, %p174
      %p176 = scmp.ne.s32.totalorder %s168, %s171
      %p177 = scmp.eq.s32.totalorder %s17, 0
      %p178 = por %p176, %p177
      %p179 = scmp.ne.s32.totalorder %s168, %s171
      %p180 = scmp.eq.s32.totalorder %s22, 4
      %p181 = por %p179, %p180
      %p182 = scmp.ne.s32.totalorder %s171, %s172
      %p183 = scmp.eq.s32.totalorder %s22, 0
      %p184 = por %p182, %p183
      %p185 = scmp.ne.s32.totalorder %s171, %s172
      %p186 = scmp.eq.s32.totalorder %s23, 4
      %p187 = por %p185, %p186
      %p189 = scmp.ne.s32.totalorder %s172, %s188
      %p190 = scmp.eq.s32.totalorder %s23, 0
      %p191 = por %p189, %p190
      %s193 = sadd.s32 %s192, 1
      %p196 = scmp.eq.s32.totalorder %s17, 4
      %p197 = scmp.ne.s32.totalorder %s192, %s194
      %p198 = scmp.eq.s32.totalorder %s17, 0
      %p199 = por %p197, %p198
      %p200 = scmp.ne.s32.totalorder %s192, %s194
      %p201 = scmp.eq.s32.totalorder %s22, 4
      %p202 = por %p200, %p201
      %p203 = scmp.ne.s32.totalorder %s194, %s195
      %p204 = scmp.eq.s32.totalorder %s22, 0
      %p205 = por %p203, %p204
      %p206 = scmp.ne.s32.totalorder %s194, %s195
      %p207 = scmp.eq.s32.totalorder %s23, 4
      %p208 = por %p206, %p207
      %p210 = scmp.ne.s32.totalorder %s195, %s209
      %p211 = scmp.eq.s32.totalorder %s23, 0
      %p212 = por %p210, %p211
      %s214 = sadd.s32 %s213, 1
      %p217 = scmp.eq.s32.totalorder %s17, 4
      %p218 = scmp.ne.s32.totalorder %s213, %s215
      %p219 = scmp.eq.s32.totalorder %s17, 0
      %p220 = por %p218, %p219
      %p221 = scmp.ne.s32.totalorder %s213, %s215
      %p222 = scmp.eq.s32.totalorder %s22, 4
      %p223 = por %p221, %p222
      %p224 = scmp.ne.s32.totalorder %s215, %s216
      %p225 = scmp.eq.s32.totalorder %s22, 0
      %p226 = por %p224, %p225
      %p227 = scmp.ne.s32.totalorder %s215, %s216
      %p228 = scmp.eq.s32.totalorder %s23, 4
      %p229 = por %p227, %p228
      %p231 = scmp.ne.s32.totalorder %s216, %s230
      %p232 = scmp.eq.s32.totalorder %s23, 0
      %p233 = por %p231, %p232
      %p234 = scmp.le.s32.totalorder 1, %s17
      %p235 = scmp.lt.s32.totalorder %s17, 6
      %p236 = pnand %p234, %p235
      %p237 = pneg %p236
      // Predicated region
      $region9: #{graph_convolution_core.1} parent=5 // pred_check
        _
      $region10: #{graph_convolution_core.1} parent=5 // pred_check_branch
        %239 = sbr.rel (%p236) target = $region12
      $region11: #{graph_convolution_core.1} parent=5 // pred_region
        %s240 = ssub.s32 %s17, 1
        // Predicated region
        $region13: #{graph_convolution_core.1} parent=11 // pred_check
          %p241 = pneg %p38
        $region14: #{graph_convolution_core.1} parent=11 // pred_check_branch
          %243 = sbr.rel (%p241) target = $region16
        $region15: #{graph_convolution_core.1} parent=11 // pred_region
          _
        $region16: #{graph_convolution_core.1} parent=11 // pred_fallthru
          _
        // Predicated region
        $region17: #{graph_convolution_core.1} parent=11 // pred_check
          %p244 = pneg %p59
        $region18: #{graph_convolution_core.1} parent=11 // pred_check_branch
          %246 = sbr.rel (%p244) target = $region20
        $region19: #{graph_convolution_core.1} parent=11 // pred_region
          _
        $region20: #{graph_convolution_core.1} parent=11 // pred_fallthru
          _
        // Predicated region
        $region21: #{graph_convolution_core.1} parent=11 // pred_check
          %p247 = pneg %p106
        $region22: #{graph_convolution_core.1} parent=11 // pred_check_branch
          %249 = sbr.rel (%p247) target = $region24
        $region23: #{graph_convolution_core.1} parent=11 // pred_region
          _
        $region24: #{graph_convolution_core.1} parent=11 // pred_fallthru
          _
      $region12: #{graph_convolution_core.1} parent=5 // pred_fallthru
        _
      %p250 = scmp.lt.s32.totalorder %s17, 5
      // Predicated region
      $region25: #{graph_convolution_core.1} parent=5 // pred_check
        %p251 = pneg %p250
      $region26: #{graph_convolution_core.1} parent=5 // pred_check_branch
        %253 = sbr.rel (%p251) target = $region28
      $region27: #{graph_convolution_core.1} parent=5 // pred_region
        // Predicated region
        $region29: #{graph_convolution_core.1} parent=27 // pred_check
          %p254 = pneg %p79
        $region30: #{graph_convolution_core.1} parent=27 // pred_check_branch
          %256 = sbr.rel (%p254) target = $region32
        $region31: #{graph_convolution_core.1} parent=27 // pred_region
          %p257 = scmp.lt.s32.totalorder %s17, 4
          %s258 = scalar_select %p257, %s17, 4
          %s259 = smul.addr %s258, 8
          %s260 = scalar_lea.vmem %s2, %s259
        $region32: #{graph_convolution_core.1} parent=27 // pred_fallthru
          _
        // Predicated region
        $region33: #{graph_convolution_core.1} parent=27 // pred_check
          %p261 = pneg %p126
        $region34: #{graph_convolution_core.1} parent=27 // pred_check_branch
          %263 = sbr.rel (%p261) target = $region36
        $region35: #{graph_convolution_core.1} parent=27 // pred_region
          %p264 = scmp.lt.s32.totalorder %s17, 4
          %s265 = scalar_select %p264, %s17, 4
          %s266 = smul.addr %s265, 2
          %s267 = smul.addr %s266, 8
          %s268 = scalar_lea.vmem %s4, %s267
        $region36: #{graph_convolution_core.1} parent=27 // pred_fallthru
          _
        // Predicated region
        $region37: #{graph_convolution_core.1} parent=27 // pred_check
          %p269 = pneg %p152
        $region38: #{graph_convolution_core.1} parent=27 // pred_check_branch
          %271 = sbr.rel (%p269) target = $region40
        $region39: #{graph_convolution_core.1} parent=27 // pred_region
          %p272 = scmp.lt.s32.totalorder %s17, 4
          %s273 = scalar_select %p272, %s17, 4
          %s274 = smul.addr %s273, 2
          %s275 = smul.addr %s274, 8
          %s276 = scalar_lea.vmem %s5, %s275
        $region40: #{graph_convolution_core.1} parent=27 // pred_fallthru
          _
        // Predicated region
        $region41: #{graph_convolution_core.1} parent=27 // pred_check
          %p277 = pneg %p178
        $region42: #{graph_convolution_core.1} parent=27 // pred_check_branch
          %279 = sbr.rel (%p277) target = $region44
        $region43: #{graph_convolution_core.1} parent=27 // pred_region
          %p280 = scmp.lt.s32.totalorder %s17, 4
          %s281 = scalar_select %p280, %s17, 4
          %s282 = smul.addr %s281, 3
          %s283 = smul.addr %s282, 8
          %s284 = scalar_lea.vmem %s6, %s283
        $region44: #{graph_convolution_core.1} parent=27 // pred_fallthru
          _
      $region28: #{graph_convolution_core.1} parent=5 // pred_fallthru
        _
      %p285 = scmp.le.s32.totalorder 1, %s17
      %p286 = scmp.lt.s32.totalorder %s17, 6
      %p287 = pnand %p285, %p286
      %p288 = pneg %p287
      // Predicated region
      $region45: #{graph_convolution_core.1} parent=5 // pred_check
        _
      $region46: #{graph_convolution_core.1} parent=5 // pred_check_branch
        %290 = sbr.rel (%p287) target = $region48
      $region47: #{graph_convolution_core.1} parent=5 // pred_region
        %s291 = ssub.s32 %s17, 1
        %p292 = pneg %p38
        %p293 = pneg %p35
        %p294 = pneg %p59
        %p295 = pneg %p56
        %p296 = scmp.lt.s32.totalorder %s22, 4
        %s297 = scalar_select %p296, %s22, 4
        %s298 = smul.addr %s297, 8
        %s299 = scalar_lea.vmem %s2, %s298
        %p300 = pneg %p85
        %p301 = pneg %p82
        %p302 = pneg %p106
        %p303 = pneg %p103
        %p304 = scmp.lt.s32.totalorder %s22, 4
        %s305 = scalar_select %p304, %s22, 4
        %s306 = smul.addr %s305, 2
        %s307 = smul.addr %s306, 8
        %s308 = scalar_lea.vmem %s4, %s307
        %p309 = pneg %p132
        %p310 = pneg %p129
        %p311 = scmp.lt.s32.totalorder %s22, 4
        %s312 = scalar_select %p311, %s22, 4
        %s313 = smul.addr %s312, 2
        %s314 = smul.addr %s313, 8
        %s315 = scalar_lea.vmem %s5, %s314
        %p316 = pneg %p158
        %p317 = pneg %p155
        %p318 = scmp.lt.s32.totalorder %s22, 4
        %s319 = scalar_select %p318, %s22, 4
        %s320 = smul.addr %s319, 3
        %s321 = smul.addr %s320, 8
        %s322 = scalar_lea.vmem %s6, %s321
        %p323 = pneg %p184
        %p324 = pneg %p181
        %p325 = pneg %p205
        %p326 = pneg %p202
        %p327 = pneg %p226
        %p328 = pneg %p223
        %p329 = scmp.lt.s32.totalorder %s22, 4
        %s330 = scalar_select %p329, %s22, 4
        %s331 = smul.addr %s330, 8
        %s332 = scalar_lea.vmem %s2, %s331
        %p333 = scmp.lt.s32.totalorder %s22, 4
        %s334 = scalar_select %p333, %s22, 4
        %s335 = smul.addr %s334, 2
        %s336 = smul.addr %s335, 8
        %s337 = scalar_lea.vmem %s4, %s336
        %p338 = scmp.lt.s32.totalorder %s22, 4
        %s339 = scalar_select %p338, %s22, 4
        %s340 = smul.addr %s339, 2
        %s341 = smul.addr %s340, 8
        %s342 = scalar_lea.vmem %s5, %s341
        %p343 = scmp.lt.s32.totalorder %s22, 4
        %s344 = scalar_select %p343, %s22, 4
        %s345 = smul.addr %s344, 3
        %s346 = smul.addr %s345, 8
        %s347 = scalar_lea.vmem %s6, %s346
        %p348 = scmp.eq.s32.totalorder %s22, 0
        // Predicated region
        $region49: #{graph_convolution_core.1} parent=47 // pred_check
          %p349 = pneg %p348
        $region50: #{graph_convolution_core.1} parent=47 // pred_check_branch
          %351 = sbr.rel (%p349) target = $region52
        $region51: #{graph_convolution_core.1} parent=47 // pred_region
          %352 = vst [vmem:[#allocation2] sm:$0xff] 0.0
          %353 = vst [vmem:[#allocation2 + $0x8] sm:$0xff] 0.0
          %354 = vst [vmem:[#allocation4] sm:$0xff] 0.0
          %355 = vst [vmem:[#allocation4 + $0x8] sm:$0xff] 0.0
          %356 = vst [vmem:[#allocation4 + $0x10] sm:$0xff] 0.0
        $region52: #{graph_convolution_core.1} parent=47 // pred_fallthru
          _
        %v357 = vld [vmem:[%s332] sm:$0xff]
        %v358 = vld [vmem:[%s337] sm:$0xff]
        %v359 = vld [vmem:[%s337 + $0x8] sm:$0xff]
        %v360 = vld [vmem:[%s342] sm:$0xff]
        %v361 = vld [vmem:[%s342 + $0x8] sm:$0xff]
        %v362 = vld [vmem:[%s347] sm:$0xff]
        %v363 = vld [vmem:[%s347 + $0x8] sm:$0xff]
        %v364 = vld [vmem:[%s347 + $0x10] sm:$0xff]
        %v365 = vld [vmem:[%s1] sm:$0xff]
        %v366 = vld [vmem:[%s1 + $0x8] sm:$0xff]
        %v367 = vld [vmem:[%s1 + $0x10] sm:$0xff]
        %369 = vset.pattern.permute.xlu0 0
        %370 = vperm.xlu0 %369, %v362
        %v371 = vpop.permute.xlu0 %370
        %374 = vset.pattern.permute.xlu0 0
        %375 = vperm.xlu0 %374, %v363
        %v376 = vpop.permute.xlu0 %375
        %379 = vset.pattern.permute.xlu0 0
        %380 = vperm.xlu0 %379, %v364
        %v381 = vpop.permute.xlu0 %380
        %v383 = vmul.f32 %v365, %v371
        %v384 = vmul.f32 %v366, %v376
        %v385 = vmul.f32 %v367, %v381
        %vm386 = vcmask 195584
        %v388 = vsel %vm386, %v358, 0
        %v391 = vsel %vm386, %v359, 0
        %393 = vmatprep.subr.mxu0 0.0
        %394 = vmatpush1.msra.mxu0 %v383
        %395 = vmatprep.subr.mxu0 0.0
        %396 = vmatpush1.msra.mxu0 %v384
        %397 = vmatprep.subr.mxu0 0.0
        %398 = vmatpush1.msra.mxu0 %v385
        %399 = vmatprep.subr.mxu0 0.0
        %400 = vmatpush1.msra.mxu0 0.0
        %401 = vmatprep.subr.mxu0 0.0
        %402 = vmatpush1.msra.mxu0 0.0
        %403 = vmatprep.subr.mxu0 0.0
        %404 = vmatpush1.msra.mxu0 0.0
        %405 = vmatprep.subr.mxu0 0.0
        %406 = vmatpush1.msra.mxu0 0.0
        %407 = vmatprep.subr.mxu0 0.0
        %408 = vmatpush1.msra.mxu0 0.0
        %409 = vmatprep.subr.mxu0 0.0
        %410 = vmatpush1.msra.mxu0 0.0
        %411 = vmatprep.subr.mxu0 0.0
        %412 = vmatpush1.msra.mxu0 0.0
        %413 = vmatprep.subr.mxu0 0.0
        %414 = vmatpush1.msra.mxu0 0.0
        %415 = vmatprep.subr.mxu0 0.0
        %416 = vmatpush1.msra.mxu0 0.0
        %417 = vmatprep.subr.mxu0 0.0
        %418 = vmatpush1.msra.mxu0 0.0
        %419 = vmatprep.subr.mxu0 0.0
        %420 = vmatpush1.msra.mxu0 0.0
        %421 = vmatprep.subr.mxu0 0.0
        %422 = vmatpush1.msra.mxu0 0.0
        %423 = vmatprep.subr.mxu0 0.0
        %424 = vmatpush1.msra.mxu0 0.0
        %425 = vmatprep.subr.mxu0 0.0
        %426 = vmatpush1.msra.mxu0 0.0
        %427 = vmatprep.subr.mxu0 0.0
        %428 = vmatpush1.msra.mxu0 0.0
        %429 = vmatprep.subr.mxu0 0.0
        %430 = vmatpush1.msra.mxu0 0.0
        %431 = vmatprep.subr.mxu0 0.0
        %432 = vmatpush1.msra.mxu0 0.0
        %433 = vmatprep.subr.mxu0 0.0
        %434 = vmatpush1.msra.mxu0 0.0
        %435 = vmatprep.subr.mxu0 0.0
        %436 = vmatpush1.msra.mxu0 0.0
        %437 = vmatprep.subr.mxu0 0.0
        %438 = vmatpush1.msra.mxu0 0.0
        %439 = vmatprep.subr.mxu0 0.0
        %440 = vmatpush1.msra.mxu0 0.0
        %441 = vmatprep.subr.mxu0 0.0
        %442 = vmatpush1.msra.mxu0 0.0
        %443 = vmatprep.subr.mxu0 0.0
        %444 = vmatpush1.msra.mxu0 0.0
        %445 = vmatprep.subr.mxu0 0.0
        %446 = vmatpush1.msra.mxu0 0.0
        %447 = vmatprep.subr.mxu0 0.0
        %448 = vmatpush1.msra.mxu0 0.0
        %449 = vmatprep.subr.mxu0 0.0
        %450 = vmatpush1.msra.mxu0 0.0
        %451 = vmatprep.subr.mxu0 0.0
        %452 = vmatpush1.msra.mxu0 0.0
        %453 = vmatprep.subr.mxu0 0.0
        %454 = vmatpush1.msra.mxu0 0.0
        %455 = vmatprep.subr.mxu0 0.0
        %456 = vmatpush1.msra.mxu0 0.0
        %457 = vmatprep.mubr.f32.mxu0 0.0
        %458 = vmatmul.mubr.f32.gmra.mrb[0].mxu0 %v388
        %v459 = vpop.f32.mrb[0].mxu0
        %v460 = vadd.f32 0.0, %v459
        %v461 = vpop.f32.mrb[0].mxu0
        %462 = vmatprep.mubr.f32.mxu0 0.0
        %463 = vmatmul.mubr.f32.gmra.mrb[0].mxu0 %v391
        %v464 = vpop.f32.mrb[0].mxu0
        %v465 = vadd.f32 0.0, %v464
        %v466 = vpop.f32.mrb[0].mxu0
        %467 = vdwg.mxu0
        %v468 = vld [vmem:[#allocation2] sm:$0xff]
        %v469 = vld [vmem:[#allocation2 + $0x8] sm:$0xff]
        %vm470 = vcmask 64512
        %v472 = vsel %vm470, %v460, 0
        %v475 = vsel %vm470, %v465, 0
        %477 = vmatprep.subr.mxu0 0.0
        %478 = vmatpush1.msra.mxu0 %v357
        %479 = vmatprep.subr.mxu0 0.0
        %480 = vmatpush1.msra.mxu0 0.0
        %481 = vmatprep.subr.mxu0 0.0
        %482 = vmatpush1.msra.mxu0 0.0
        %483 = vmatprep.subr.mxu0 0.0
        %484 = vmatpush1.msra.mxu0 0.0
        %485 = vmatprep.subr.mxu0 0.0
        %486 = vmatpush1.msra.mxu0 0.0
        %487 = vmatprep.subr.mxu0 0.0
        %488 = vmatpush1.msra.mxu0 0.0
        %489 = vmatprep.subr.mxu0 0.0
        %490 = vmatpush1.msra.mxu0 0.0
        %491 = vmatprep.subr.mxu0 0.0
        %492 = vmatpush1.msra.mxu0 0.0
        %493 = vmatprep.subr.mxu0 0.0
        %494 = vmatpush1.msra.mxu0 0.0
        %495 = vmatprep.subr.mxu0 0.0
        %496 = vmatpush1.msra.mxu0 0.0
        %497 = vmatprep.subr.mxu0 0.0
        %498 = vmatpush1.msra.mxu0 0.0
        %499 = vmatprep.subr.mxu0 0.0
        %500 = vmatpush1.msra.mxu0 0.0
        %501 = vmatprep.subr.mxu0 0.0
        %502 = vmatpush1.msra.mxu0 0.0
        %503 = vmatprep.subr.mxu0 0.0
        %504 = vmatpush1.msra.mxu0 0.0
        %505 = vmatprep.subr.mxu0 0.0
        %506 = vmatpush1.msra.mxu0 0.0
        %507 = vmatprep.subr.mxu0 0.0
        %508 = vmatpush1.msra.mxu0 0.0
        %509 = vmatprep.subr.mxu0 0.0
        %510 = vmatpush1.msra.mxu0 0.0
        %511 = vmatprep.subr.mxu0 0.0
        %512 = vmatpush1.msra.mxu0 0.0
        %513 = vmatprep.subr.mxu0 0.0
        %514 = vmatpush1.msra.mxu0 0.0
        %515 = vmatprep.subr.mxu0 0.0
        %516 = vmatpush1.msra.mxu0 0.0
        %517 = vmatprep.subr.mxu0 0.0
        %518 = vmatpush1.msra.mxu0 0.0
        %519 = vmatprep.subr.mxu0 0.0
        %520 = vmatpush1.msra.mxu0 0.0
        %521 = vmatprep.subr.mxu0 0.0
        %522 = vmatpush1.msra.mxu0 0.0
        %523 = vmatprep.subr.mxu0 0.0
        %524 = vmatpush1.msra.mxu0 0.0
        %525 = vmatprep.subr.mxu0 0.0
        %526 = vmatpush1.msra.mxu0 0.0
        %527 = vmatprep.subr.mxu0 0.0
        %528 = vmatpush1.msra.mxu0 0.0
        %529 = vmatprep.subr.mxu0 0.0
        %530 = vmatpush1.msra.mxu0 0.0
        %531 = vmatprep.subr.mxu0 0.0
        %532 = vmatpush1.msra.mxu0 0.0
        %533 = vmatprep.subr.mxu0 0.0
        %534 = vmatpush1.msra.mxu0 0.0
        %535 = vmatprep.subr.mxu0 0.0
        %536 = vmatpush1.msra.mxu0 0.0
        %537 = vmatprep.subr.mxu0 0.0
        %538 = vmatpush1.msra.mxu0 0.0
        %539 = vmatprep.subr.mxu0 0.0
        %540 = vmatpush1.msra.mxu0 0.0
        %541 = vmatprep.mubr.f32.mxu0 0.0
        %542 = vmatmul.mubr.f32.gmra.mrb[0].mxu0 %v472
        %v543 = vpop.f32.mrb[0].mxu0
        %v544 = vadd.f32 0.0, %v543
        %v545 = vpop.f32.mrb[0].mxu0
        %546 = vmatprep.mubr.f32.mxu0 0.0
        %547 = vmatmul.mubr.f32.gmra.mrb[0].mxu0 %v475
        %v548 = vpop.f32.mrb[0].mxu0
        %v549 = vadd.f32 0.0, %v548
        %v550 = vpop.f32.mrb[0].mxu0
        %551 = vdwg.mxu0
        %553 = vset.pattern.permute.xlu0 0
        %554 = vperm.xlu0 %553, %v360
        %v555 = vpop.permute.xlu0 %554
        %558 = vset.pattern.permute.xlu0 0
        %559 = vperm.xlu0 %558, %v361
        %v560 = vpop.permute.xlu0 %559
        %v562 = vmul.f32 %v555, %v544
        %v563 = vmul.f32 %v560, %v549
        %v564 = vadd.f32 %v468, %v562
        %v565 = vadd.f32 %v469, %v563
        %566 = vst [vmem:[#allocation2] sm:$0xff] %v564
        %567 = vst [vmem:[#allocation2 + $0x8] sm:$0xff] %v565
        %v568 = vld [vmem:[%s0] sm:$0xff]
        %v569 = vld [vmem:[%s0 + $0x8] sm:$0xff]
        %v570 = vmul.f32 %v568, %v555
        %v571 = vmul.f32 %v569, %v560
        %572 = vxpose.xlu0.b32.start [1/16] %v358, 128
        %573 = vxpose.xlu0.b32.cont [2/16] %v359, 128
        %574 = vxpose.xlu0.b32.cont [3/16] 0.0, 128
        %575 = vxpose.xlu0.b32.cont [4/16] 0.0, 128
        %576 = vxpose.xlu0.b32.cont [5/16] 0.0, 128
        %577 = vxpose.xlu0.b32.cont [6/16] 0.0, 128
        %578 = vxpose.xlu0.b32.cont [7/16] 0.0, 128
        %579 = vxpose.xlu0.b32.cont [8/16] 0.0, 128
        %580 = vxpose.xlu0.b32.cont [9/16] 0.0, 128
        %581 = vxpose.xlu0.b32.cont [10/16] 0.0, 128
        %582 = vxpose.xlu0.b32.cont [11/16] 0.0, 128
        %583 = vxpose.xlu0.b32.cont [12/16] 0.0, 128
        %584 = vxpose.xlu0.b32.cont [13/16] 0.0, 128
        %585 = vxpose.xlu0.b32.cont [14/16] 0.0, 128
        %586 = vxpose.xlu0.b32.cont [15/16] 0.0, 128
        %587 = vxpose.xlu0.b32.end [16/16] 0.0, 128
        %v588 = vpop.trf.xlu0
        %v589 = vpop.trf.xlu0
        %v590 = vpop.trf.xlu0
        %v591 = vpop.trf.xlu0
        %v592 = vpop.trf.xlu0
        %v593 = vpop.trf.xlu0
        %v594 = vpop.trf.xlu0
        %v595 = vpop.trf.xlu0
        %v596 = vpop.trf.xlu0
        %v597 = vpop.trf.xlu0
        %v598 = vpop.trf.xlu0
        %v599 = vpop.trf.xlu0
        %v600 = vpop.trf.xlu0
        %v601 = vpop.trf.xlu0
        %v602 = vpop.trf.xlu0
        %v603 = vpop.trf.xlu0
        %vm604 = vcmask 130048
        %v606 = vsel %vm604, %v588, 0
        %v609 = vsel %vm604, %v589, 0
        %v612 = vsel %vm604, %v590, 0
        %614 = vmatprep.subr.mxu0 0.0
        %615 = vmatpush1.msra.mxu0 %v570
        %616 = vmatprep.subr.mxu0 0.0
        %617 = vmatpush1.msra.mxu0 %v571
        %618 = vmatprep.subr.mxu0 0.0
        %619 = vmatpush1.msra.mxu0 0.0
        %620 = vmatprep.subr.mxu0 0.0
        %621 = vmatpush1.msra.mxu0 0.0
        %622 = vmatprep.subr.mxu0 0.0
        %623 = vmatpush1.msra.mxu0 0.0
        %624 = vmatprep.subr.mxu0 0.0
        %625 = vmatpush1.msra.mxu0 0.0
        %626 = vmatprep.subr.mxu0 0.0
        %627 = vmatpush1.msra.mxu0 0.0
        %628 = vmatprep.subr.mxu0 0.0
        %629 = vmatpush1.msra.mxu0 0.0
        %630 = vmatprep.subr.mxu0 0.0
        %631 = vmatpush1.msra.mxu0 0.0
        %632 = vmatprep.subr.mxu0 0.0
        %633 = vmatpush1.msra.mxu0 0.0
        %634 = vmatprep.subr.mxu0 0.0
        %635 = vmatpush1.msra.mxu0 0.0
        %636 = vmatprep.subr.mxu0 0.0
        %637 = vmatpush1.msra.mxu0 0.0
        %638 = vmatprep.subr.mxu0 0.0
        %639 = vmatpush1.msra.mxu0 0.0
        %640 = vmatprep.subr.mxu0 0.0
        %641 = vmatpush1.msra.mxu0 0.0
        %642 = vmatprep.subr.mxu0 0.0
        %643 = vmatpush1.msra.mxu0 0.0
        %644 = vmatprep.subr.mxu0 0.0
        %645 = vmatpush1.msra.mxu0 0.0
        %646 = vmatprep.subr.mxu0 0.0
        %647 = vmatpush1.msra.mxu0 0.0
        %648 = vmatprep.subr.mxu0 0.0
        %649 = vmatpush1.msra.mxu0 0.0
        %650 = vmatprep.subr.mxu0 0.0
        %651 = vmatpush1.msra.mxu0 0.0
        %652 = vmatprep.subr.mxu0 0.0
        %653 = vmatpush1.msra.mxu0 0.0
        %654 = vmatprep.subr.mxu0 0.0
        %655 = vmatpush1.msra.mxu0 0.0
        %656 = vmatprep.subr.mxu0 0.0
        %657 = vmatpush1.msra.mxu0 0.0
        %658 = vmatprep.subr.mxu0 0.0
        %659 = vmatpush1.msra.mxu0 0.0
        %660 = vmatprep.subr.mxu0 0.0
        %661 = vmatpush1.msra.mxu0 0.0
        %662 = vmatprep.subr.mxu0 0.0
        %663 = vmatpush1.msra.mxu0 0.0
        %664 = vmatprep.subr.mxu0 0.0
        %665 = vmatpush1.msra.mxu0 0.0
        %666 = vmatprep.subr.mxu0 0.0
        %667 = vmatpush1.msra.mxu0 0.0
        %668 = vmatprep.subr.mxu0 0.0
        %669 = vmatpush1.msra.mxu0 0.0
        %670 = vmatprep.subr.mxu0 0.0
        %671 = vmatpush1.msra.mxu0 0.0
        %672 = vmatprep.subr.mxu0 0.0
        %673 = vmatpush1.msra.mxu0 0.0
        %674 = vmatprep.subr.mxu0 0.0
        %675 = vmatpush1.msra.mxu0 0.0
        %676 = vmatprep.subr.mxu0 0.0
        %677 = vmatpush1.msra.mxu0 0.0
        %678 = vmatprep.mubr.f32.mxu0 0.0
        %679 = vmatmul.mubr.f32.gmra.mrb[0].mxu0 %v606
        %v680 = vpop.f32.mrb[0].mxu0
        %v681 = vadd.f32 0.0, %v680
        %v682 = vpop.f32.mrb[0].mxu0
        %683 = vmatprep.mubr.f32.mxu0 0.0
        %684 = vmatmul.mubr.f32.gmra.mrb[0].mxu0 %v609
        %v685 = vpop.f32.mrb[0].mxu0
        %v686 = vadd.f32 0.0, %v685
        %v687 = vpop.f32.mrb[0].mxu0
        %688 = vmatprep.mubr.f32.mxu0 0.0
        %689 = vmatmul.mubr.f32.gmra.mrb[0].mxu0 %v612
        %v690 = vpop.f32.mrb[0].mxu0
        %v691 = vadd.f32 0.0, %v690
        %v692 = vpop.f32.mrb[0].mxu0
        %693 = vdwg.mxu0
        %v694 = vld [vmem:[#allocation4] sm:$0xff]
        %v695 = vld [vmem:[#allocation4 + $0x8] sm:$0xff]
        %v696 = vld [vmem:[#allocation4 + $0x10] sm:$0xff]
        %v698 = vsel %vm470, %v681, 0
        %v701 = vsel %vm470, %v686, 0
        %v704 = vsel %vm470, %v691, 0
        %706 = vmatprep.subr.mxu0 0.0
        %707 = vmatpush1.msra.mxu0 %v357
        %708 = vmatprep.subr.mxu0 0.0
        %709 = vmatpush1.msra.mxu0 0.0
        %710 = vmatprep.subr.mxu0 0.0
        %711 = vmatpush1.msra.mxu0 0.0
        %712 = vmatprep.subr.mxu0 0.0
        %713 = vmatpush1.msra.mxu0 0.0
        %714 = vmatprep.subr.mxu0 0.0
        %715 = vmatpush1.msra.mxu0 0.0
        %716 = vmatprep.subr.mxu0 0.0
        %717 = vmatpush1.msra.mxu0 0.0
        %718 = vmatprep.subr.mxu0 0.0
        %719 = vmatpush1.msra.mxu0 0.0
        %720 = vmatprep.subr.mxu0 0.0
        %721 = vmatpush1.msra.mxu0 0.0
        %722 = vmatprep.subr.mxu0 0.0
        %723 = vmatpush1.msra.mxu0 0.0
        %724 = vmatprep.subr.mxu0 0.0
        %725 = vmatpush1.msra.mxu0 0.0
        %726 = vmatprep.subr.mxu0 0.0
        %727 = vmatpush1.msra.mxu0 0.0
        %728 = vmatprep.subr.mxu0 0.0
        %729 = vmatpush1.msra.mxu0 0.0
        %730 = vmatprep.subr.mxu0 0.0
        %731 = vmatpush1.msra.mxu0 0.0
        %732 = vmatprep.subr.mxu0 0.0
        %733 = vmatpush1.msra.mxu0 0.0
        %734 = vmatprep.subr.mxu0 0.0
        %735 = vmatpush1.msra.mxu0 0.0
        %736 = vmatprep.subr.mxu0 0.0
        %737 = vmatpush1.msra.mxu0 0.0
        %738 = vmatprep.subr.mxu0 0.0
        %739 = vmatpush1.msra.mxu0 0.0
        %740 = vmatprep.subr.mxu0 0.0
        %741 = vmatpush1.msra.mxu0 0.0
        %742 = vmatprep.subr.mxu0 0.0
        %743 = vmatpush1.msra.mxu0 0.0
        %744 = vmatprep.subr.mxu0 0.0
        %745 = vmatpush1.msra.mxu0 0.0
        %746 = vmatprep.subr.mxu0 0.0
        %747 = vmatpush1.msra.mxu0 0.0
        %748 = vmatprep.subr.mxu0 0.0
        %749 = vmatpush1.msra.mxu0 0.0
        %750 = vmatprep.subr.mxu0 0.0
        %751 = vmatpush1.msra.mxu0 0.0
        %752 = vmatprep.subr.mxu0 0.0
        %753 = vmatpush1.msra.mxu0 0.0
        %754 = vmatprep.subr.mxu0 0.0
        %755 = vmatpush1.msra.mxu0 0.0
        %756 = vmatprep.subr.mxu0 0.0
        %757 = vmatpush1.msra.mxu0 0.0
        %758 = vmatprep.subr.mxu0 0.0
        %759 = vmatpush1.msra.mxu0 0.0
        %760 = vmatprep.subr.mxu0 0.0
        %761 = vmatpush1.msra.mxu0 0.0
        %762 = vmatprep.subr.mxu0 0.0
        %763 = vmatpush1.msra.mxu0 0.0
        %764 = vmatprep.subr.mxu0 0.0
        %765 = vmatpush1.msra.mxu0 0.0
        %766 = vmatprep.subr.mxu0 0.0
        %767 = vmatpush1.msra.mxu0 0.0
        %768 = vmatprep.subr.mxu0 0.0
        %769 = vmatpush1.msra.mxu0 0.0
        %770 = vmatprep.mubr.f32.mxu0 0.0
        %771 = vmatmul.mubr.f32.gmra.mrb[0].mxu0 %v698
        %v772 = vpop.f32.mrb[0].mxu0
        %v773 = vadd.f32 0.0, %v772
        %v774 = vpop.f32.mrb[0].mxu0
        %775 = vmatprep.mubr.f32.mxu0 0.0
        %776 = vmatmul.mubr.f32.gmra.mrb[0].mxu0 %v701
        %v777 = vpop.f32.mrb[0].mxu0
        %v778 = vadd.f32 0.0, %v777
        %v779 = vpop.f32.mrb[0].mxu0
        %780 = vmatprep.mubr.f32.mxu0 0.0
        %781 = vmatmul.mubr.f32.gmra.mrb[0].mxu0 %v704
        %v782 = vpop.f32.mrb[0].mxu0
        %v783 = vadd.f32 0.0, %v782
        %v784 = vpop.f32.mrb[0].mxu0
        %785 = vdwg.mxu0
        %v786 = vmul.f32 %v371, %v773
        %v787 = vmul.f32 %v376, %v778
        %v788 = vmul.f32 %v381, %v783
        %v789 = vadd.f32 %v694, %v786
        %v790 = vadd.f32 %v695, %v787
        %v791 = vadd.f32 %v696, %v788
        %792 = vst [vmem:[#allocation4] sm:$0xff] %v789
        %793 = vst [vmem:[#allocation4 + $0x8] sm:$0xff] %v790
        %794 = vst [vmem:[#allocation4 + $0x10] sm:$0xff] %v791
        %p795 = scmp.eq.s32.totalorder %s22, 4
        // Predicated region
        $region53: #{graph_convolution_core.1} parent=47 // pred_check
          %p796 = pneg %p795
        $region54: #{graph_convolution_core.1} parent=47 // pred_check_branch
          %798 = sbr.rel (%p796) target = $region56
        $region55: #{graph_convolution_core.1} parent=47 // pred_region
          %v799 = vld [vmem:[%s3] sm:$0x1]
          %v800 = vld [vmem:[#allocation2] sm:$0xff]
          %v801 = vld [vmem:[#allocation2 + $0x8] sm:$0xff]
          %v803 = vlaneseq
          %v804 = vshrl.u32 %v803, 7
          %v805 = vsub.s32 0, %v804
          %v806 = vrot.slane %v799, %v805
          %v808 = vadd.f32 %v800, %v806
          %v809 = vadd.f32 %v801, %v806
          %v810 = vmax.f32 %v808, 0.0
          %v811 = vmax.f32 %v809, 0.0
          %812 = vst [vmem:[#allocation2] sm:$0xff] %v810
          %813 = vst [vmem:[#allocation2 + $0x8] sm:$0xff] %v811
          %v814 = vld [vmem:[#allocation4] sm:$0xff]
          %v815 = vld [vmem:[#allocation4 + $0x8] sm:$0xff]
          %v816 = vld [vmem:[#allocation4 + $0x10] sm:$0xff]
          %v817 = vadd.f32 %v814, %v806
          %v818 = vadd.f32 %v815, %v806
          %v819 = vadd.f32 %v816, %v806
          %v820 = vmax.f32 %v817, 0.0
          %v821 = vmax.f32 %v818, 0.0
          %v822 = vmax.f32 %v819, 0.0
          %823 = vst [vmem:[#allocation4] sm:$0xff] %v820
          %824 = vst [vmem:[#allocation4 + $0x8] sm:$0xff] %v821
          %825 = vst [vmem:[#allocation4 + $0x10] sm:$0xff] %v822
        $region56: #{graph_convolution_core.1} parent=47 // pred_fallthru
          _
        // Predicated region
        $region57: #{graph_convolution_core.1} parent=47 // pred_check
          %p826 = pneg %p202
        $region58: #{graph_convolution_core.1} parent=47 // pred_check_branch
          %828 = sbr.rel (%p826) target = $region60
        $region59: #{graph_convolution_core.1} parent=47 // pred_region
          %s830 = ssub.s32 256, 256
          %831 = vsyncadd [#allocation3], %s830
          %s832 = sshll.u32 [#allocation2], 4
          %s833 = int_to_ptr.vmem [resolvable:$true] %s832
          %838 = dma.vmem_to_hbm [thread:$0]  %s833, 256, %s7, [#allocation3], 128, 128, 8
        $region60: #{graph_convolution_core.1} parent=47 // pred_fallthru
          _
        // Predicated region
        $region61: #{graph_convolution_core.1} parent=47 // pred_check
          %p839 = pneg %p223
        $region62: #{graph_convolution_core.1} parent=47 // pred_check_branch
          %841 = sbr.rel (%p839) target = $region64
        $region63: #{graph_convolution_core.1} parent=47 // pred_region
          %s843 = ssub.s32 384, 384
          %844 = vsyncadd [#allocation5], %s843
          %s845 = sshll.u32 [#allocation4], 4
          %s846 = int_to_ptr.vmem [resolvable:$true] %s845
          %851 = dma.vmem_to_hbm [thread:$0]  %s846, 384, %s8, [#allocation5], 128, 128, 8
        $region64: #{graph_convolution_core.1} parent=47 // pred_fallthru
          _
        // Predicated region
        $region65: #{graph_convolution_core.1} parent=47 // pred_check
          %p852 = pneg %p202
        $region66: #{graph_convolution_core.1} parent=47 // pred_check_branch
          %854 = sbr.rel (%p852) target = $region68
        $region67: #{graph_convolution_core.1} parent=47 // pred_region
          %855 = dma.done [#allocation3], 256
        $region68: #{graph_convolution_core.1} parent=47 // pred_fallthru
          _
        // Predicated region
        $region69: #{graph_convolution_core.1} parent=47 // pred_check
          %p856 = pneg %p223
        $region70: #{graph_convolution_core.1} parent=47 // pred_check_branch
          %858 = sbr.rel (%p856) target = $region72
        $region71: #{graph_convolution_core.1} parent=47 // pred_region
          %859 = dma.done [#allocation5], 384
        $region72: #{graph_convolution_core.1} parent=47 // pred_fallthru
          _
      $region48: #{graph_convolution_core.1} parent=5 // pred_fallthru
        _
      %p860 = scmp.le.s32.totalorder 2, %s17
      // Predicated region
      $region73: #{graph_convolution_core.1} parent=5 // pred_check
        %p861 = pneg %p860
      $region74: #{graph_convolution_core.1} parent=5 // pred_check_branch
        %863 = sbr.rel (%p861) target = $region76
      $region75: #{graph_convolution_core.1} parent=5 // pred_region
        %s864 = ssub.s32 %s17, 2
      $region76: #{graph_convolution_core.1} parent=5 // pred_fallthru
        _
    $region6: #{graph_convolution_core.1} parent=1 // loop_footer
      %s21 = sadd.s32 1, %s17
    $region7: #{graph_convolution_core.1} parent=1 // loop_footer_branch
      %16 = sbr.rel target = $region3
    $region8: #{graph_convolution_core.1} parent=1 // loop_exit
      _
    %865 = vsyncpa [#allocation3], 1
    %s866 = scalar_lea.sflag [#allocation3], 1
    %867 = vsyncpa %s866, 1
    %868 = vsyncpa [#allocation5], 1

</llo_original>
